<compile_context>
chip_gen: v5e
topology: v5e:2x2
jax: 0.10.0
libtpu: 0.0.40
codegen_flags: <defaults>
</compile_context>

<pallas_src>
import jax
import jax.numpy as jnp
from jax.experimental import pallas as pl
from jax.experimental.pallas import tpu as pltpu

_NEG_BIG = -1e30  # effectively -inf for masked (padded) key positions


def _make_attention_kernel(needs_mask):
    """needs_mask: whether a (1,1,ti_pad) additive key-mask bias input is passed."""

    def kernel(dec_ref, enc_ref, wmix_ref, wdec_ref, b_ref, *rest):
        if needs_mask:
            mask_ref, out_ref, attn_ref = rest
        else:
            out_ref, attn_ref = rest
        bblk, to, dp = dec_ref.shape
        dec = dec_ref[...]                       # (Bblk, To, Dp)    MXU input dtype
        enc = enc_ref[...]                       # (Bblk, Ti_pad, Dp)

        # scores = dec @ enc^T (contraction on the last axes; the MXU consumes
        # the RHS transposed natively, so no enc relayout is expected).
        scores = jnp.einsum('bod,bid->boi', dec, enc,
                            preferred_element_type=jnp.float32)   # (Bblk,To,Tp)

        if needs_mask:
            # Precomputed additive bias row: 0 for real keys, -1e30 for padding.
            scores = scores + mask_ref[...]

        # Softmax over the key axis; elementwise math stays in fp32.
        m = jnp.max(scores, axis=-1, keepdims=True)
        p = jnp.exp(scores - m)
        denom = jnp.sum(p, axis=-1, keepdims=True)
        # Exact reciprocal of the tiny (Bblk, To, 1) denominator: stored attn
        # rows sum to exactly 1 (the approx EUP reciprocal caused the previous
        # tolerance failure and buys nothing on a tensor this small).
        attn = p * (1.0 / denom)                                   # (Bblk,To,Tp)
        attn_ref[...] = attn.astype(attn_ref.dtype)                # lane-dense store

        # mix = attn @ enc (padded enc rows are zero -> no contribution).
        mix = jnp.einsum('boi,bid->bod', attn.astype(enc.dtype), enc,
                         preferred_element_type=jnp.float32)       # (Bblk,To,Dp)

        # Final linear without the lane-axis concat:
        #   out = tanh(mix @ W_mix + dec @ W_dec + b)
        # Fold (Bblk, To) into one MXU M dimension (weights shared over batch).
        mix2d = mix.astype(wmix_ref.dtype).reshape(bblk * to, dp)
        dec2d = dec.reshape(bblk * to, dp)
        acc = jnp.dot(mix2d, wmix_ref[...], preferred_element_type=jnp.float32)
        acc = acc + jnp.dot(dec2d, wdec_ref[...],
                            preferred_element_type=jnp.float32)
        acc = acc + b_ref[...].astype(jnp.float32)                 # (Bblk*To, Dp)
        out_ref[...] = jnp.tanh(acc).reshape(bblk, to, dp).astype(out_ref.dtype)

    return kernel


def _tpu_vmem_profile():
    """Returns (block_budget_bytes, vmem_limit_cap_bytes, prefer_even_grid).

    v5e/v6e (128 MiB VMEM, 1 TensorCore): big blocks, no grid-parity constraint.
    v7x-class (64 MiB VMEM, 2 TensorCores): smaller budget, keep grid length even.
    Unknown backend (e.g. interpret mode): conservative defaults.
    """
    try:
        cap = getattr(pltpu.get_tpu_info(), "vmem_capacity_bytes", None)
    except Exception:
        cap = None
    if cap is None:
        return 20 << 20, 40 << 20, False
    if cap <= (80 << 20):            # v7x-class
        return 20 << 20, 44 << 20, True
    return 48 << 20, 100 << 20, False  # v5e / v6e


def _block_footprint_bytes(bblk, To, ti_pad, d_pad, in_itemsize, out_itemsize):
    """Per-grid-step VMEM: double-buffered pipeline blocks + fp32 intermediates."""
    per_batch = (
        2 * (To * d_pad + ti_pad * d_pad) * in_itemsize     # dec + enc blocks (x2 buffers)
        + 2 * (To * d_pad + To * ti_pad) * out_itemsize     # out + attn blocks (x2 buffers)
        + 3 * To * ti_pad * 4                               # scores / p / attn fp32
        + 2 * To * d_pad * 4)                               # mix + acc fp32
    fixed = 2 * (2 * d_pad * d_pad * in_itemsize            # W_mix + W_dec (x2 buffers)
                 + ti_pad * 4 + d_pad * 4)                  # mask bias + bias
    return fixed + bblk * per_batch


def _pick_batch_block(B, budget_bytes, prefer_even_grid, footprint_fn):
    """Largest divisor of B whose footprint fits the budget; on v7x-class parts
    additionally keep the grid length even so both TensorCores stay busy."""
    bblk = B
    while bblk > 1 and (
            B % bblk
            or footprint_fn(bblk) > budget_bytes
            or (prefer_even_grid and B % 2 == 0 and (B // bblk) % 2)):
        bblk -= 1
    return bblk


def attention_forward(decoder_hidden, encoder_hidden, weight, bias, *,
                      batch_block=None, use_bf16_matmul=True):
    """decoder_hidden: (B, To, D), encoder_hidden: (B, Ti, D),
       weight: (D, 2D) as in nn.Linear(dim*2, dim), bias: (D,)."""
    B, To, D = decoder_hidden.shape
    _, Ti, _ = encoder_hidden.shape
    out_dtype = decoder_hidden.dtype

    # Lane-dense key axis and feature axis: pad up to multiples of 128.
    ti_pad = pl.cdiv(Ti, 128) * 128
    d_pad = pl.cdiv(D, 128) * 128
    needs_mask = ti_pad != Ti

    mm_dtype = jnp.bfloat16 if use_bf16_matmul else decoder_hidden.dtype

    dec_in = decoder_hidden
    enc_in = encoder_hidden
    if d_pad != D:
        dec_in = jnp.pad(dec_in, ((0, 0), (0, 0), (0, d_pad - D)))
    if ti_pad != Ti or d_pad != D:
        enc_in = jnp.pad(enc_in, ((0, 0), (0, ti_pad - Ti), (0, d_pad - D)))
    dec_in = dec_in.astype(mm_dtype)
    enc_in = enc_in.astype(mm_dtype)

    # Split the (D, 2D) Linear weight into mix / dec halves, pre-transposed so
    # the kernel computes x @ W directly (no concat, no in-kernel transpose).
    w_mix = weight[:, :D].T        # (D, D)
    w_dec = weight[:, D:].T        # (D, D)
    b2d = bias.reshape(1, D).astype(jnp.float32)
    if d_pad != D:
        w_mix = jnp.pad(w_mix, ((0, d_pad - D), (0, d_pad - D)))
        w_dec = jnp.pad(w_dec, ((0, d_pad - D), (0, d_pad - D)))
        b2d = jnp.pad(b2d, ((0, 0), (0, d_pad - D)))
    w_mix = w_mix.astype(mm_dtype)
    w_dec = w_dec.astype(mm_dtype)

    in_itemsize = jnp.dtype(mm_dtype).itemsize
    out_itemsize = jnp.dtype(out_dtype).itemsize
    budget, limit_cap, prefer_even = _tpu_vmem_profile()

    def footprint_fn(bblk):
        return _block_footprint_bytes(bblk, To, ti_pad, d_pad,
                                      in_itemsize, out_itemsize)

    if batch_block is None:
        batch_block = _pick_batch_block(B, budget, prefer_even, footprint_fn)
    assert B % batch_block == 0, "batch_block must divide B"
    grid = (B // batch_block,)

    # Make the VMEM budget real: explicit scoped-VMEM limit covering the block
    # footprint (with headroom), capped per generation.
    footprint = footprint_fn(batch_block)
    vmem_limit = int(min(limit_cap, max(footprint * 5 // 4 + (4 << 20), 32 << 20)))

    inputs = [dec_in, enc_in, w_mix, w_dec, b2d]
    in_specs = [
        pl.BlockSpec((batch_block, To, d_pad), lambda b: (b, 0, 0)),
        pl.BlockSpec((batch_block, ti_pad, d_pad), lambda b: (b, 0, 0)),
        pl.BlockSpec((d_pad, d_pad), lambda b: (0, 0)),
        pl.BlockSpec((d_pad, d_pad), lambda b: (0, 0)),
        pl.BlockSpec((1, d_pad), lambda b: (0, 0)),
    ]
    if needs_mask:
        key_idx = jnp.arange(ti_pad, dtype=jnp.int32)
        mask_bias = jnp.where(key_idx < Ti, 0.0, _NEG_BIG).astype(jnp.float32)
        inputs.append(mask_bias.reshape(1, 1, ti_pad))
        in_specs.append(pl.BlockSpec((1, 1, ti_pad), lambda b: (0, 0, 0)))

    flops = 2 * B * To * ti_pad * d_pad * 2 + 2 * B * To * (2 * d_pad) * d_pad
    transcendentals = B * To * ti_pad + B * To * d_pad
    bytes_accessed = (
        (dec_in.size + enc_in.size + w_mix.size + w_dec.size) * in_itemsize
        + b2d.size * 4
        + (B * To * d_pad + B * To * ti_pad) * out_itemsize)

    kernel = _make_attention_kernel(needs_mask)

    out_pad, attn_pad = pl.pallas_call(
        kernel,
        out_shape=(
            jax.ShapeDtypeStruct((B, To, d_pad), out_dtype),
            jax.ShapeDtypeStruct((B, To, ti_pad), out_dtype),
        ),
        grid_spec=pltpu.PrefetchScalarGridSpec(
            num_scalar_prefetch=0,
            grid=grid,
            in_specs=in_specs,
            out_specs=[
                pl.BlockSpec((batch_block, To, d_pad), lambda b: (b, 0, 0)),
                pl.BlockSpec((batch_block, To, ti_pad), lambda b: (b, 0, 0)),
            ],
        ),
        compiler_params=pltpu.CompilerParams(
            dimension_semantics=("parallel",),
            vmem_limit_bytes=vmem_limit),
        cost_estimate=pl.CostEstimate(
            flops=flops,
            transcendentals=transcendentals,
            bytes_accessed=bytes_accessed),
    )(*inputs)

    out = out_pad[:, :, :D] if d_pad != D else out_pad
    attn = attn_pad[:, :, :Ti] if ti_pad != Ti else attn_pad
    # TODO(synk): optional set_mask() (-inf attention mask on user indices) and a
    # flash-style online-softmax tiling over very long Ti (needed to fit v7x's
    # 64 MiB VMEM; complicated here because the full attn matrix is returned)
    # are not implemented.
    return out, attn


def attention_reference(decoder_hidden, encoder_hidden, weight, bias):
    """Pure-JAX fp32 reference mirroring the PyTorch forward."""
    attn = jnp.einsum('bod,bid->boi', decoder_hidden, encoder_hidden)
    attn = jax.nn.softmax(attn, axis=-1)
    mix = jnp.einsum('boi,bid->bod', attn, encoder_hidden)
    combined = jnp.concatenate([mix, decoder_hidden], axis=-1)   # (B, To, 2D)
    out = jnp.tanh(combined @ weight.T + bias)
    return out, attn


if __name__ == "__main__":
    B, To, Ti, D = 2, 8, 8, 32
    key = jax.random.PRNGKey(0)
    k_dec, k_enc, k_w, k_b = jax.random.split(key, 4)

    decoder_hidden = jax.random.normal(k_dec, (B, To, D), dtype=jnp.float32)
    encoder_hidden = jax.random.normal(k_enc, (B, Ti, D), dtype=jnp.float32)

    # nn.Linear(dim*2, dim): weight (D, 2D), bias (D,); U(-1/sqrt(2D), 1/sqrt(2D))
    bound = 1.0 / jnp.sqrt(2.0 * D)
    weight = jax.random.uniform(k_w, (D, 2 * D), jnp.float32, -bound, bound)
    bias = jax.random.uniform(k_b, (D,), jnp.float32, -bound, bound)

    out_ref, attn_ref = attention_reference(decoder_hidden, encoder_hidden,
                                            weight, bias)

    # fp32 MXU path: exact softmax normalization -> tight tolerance.
    out, attn = attention_forward(decoder_hidden, encoder_hidden, weight, bias,
                                  use_bf16_matmul=False)
    out = jax.block_until_ready(out)
    attn = jax.block_until_ready(attn)
    assert out.shape == (B, To, D) and attn.shape == (B, To, Ti)
    assert jnp.allclose(out, out_ref, atol=2e-3, rtol=2e-3)
    assert jnp.allclose(attn, attn_ref, atol=2e-3, rtol=2e-3)

    # bf16 MXU path (default): compare against a reference computed from
    # bf16-rounded inputs so the check tracks the kernel's actual precision.
    def _round_bf16(x):
        return x.astype(jnp.bfloat16).astype(jnp.float32)

    out_ref_bf, attn_ref_bf = attention_reference(
        _round_bf16(decoder_hidden), _round_bf16(encoder_hidden),
        _round_bf16(weight), bias)
    out_bf, attn_bf = attention_forward(decoder_hidden, encoder_hidden,
                                        weight, bias, use_bf16_matmul=True)
    out_bf = jax.block_until_ready(out_bf)
    attn_bf = jax.block_until_ready(attn_bf)
    assert out_bf.shape == (B, To, D) and attn_bf.shape == (B, To, Ti)
    assert jnp.allclose(out_bf, out_ref_bf, atol=3e-2, rtol=3e-2)
    assert jnp.allclose(attn_bf, attn_ref_bf, atol=3e-2, rtol=3e-2)

    print("KERNEL_OK")
</pallas_src>

<mosaic_0001>
module attributes {stable_mosaic.version = 11 : i64} {
  func.func @kernel(%arg0: i32, %arg1: memref<2x8x128xf32, #tpu.memory_space<vmem>>, %arg2: memref<2x128x128xf32, #tpu.memory_space<vmem>>, %arg3: memref<128x128xf32, #tpu.memory_space<vmem>>, %arg4: memref<128x128xf32, #tpu.memory_space<vmem>>, %arg5: memref<1x128xf32, #tpu.memory_space<vmem>>, %arg6: memref<1x1x128xf32, #tpu.memory_space<vmem>>, %arg7: memref<2x8x128xf32, #tpu.memory_space<vmem>>, %arg8: memref<2x8x128xf32, #tpu.memory_space<vmem>>) attributes {dimension_semantics = [#tpu.dimension_semantics<parallel>], iteration_bounds = array<i64: 1>, scalar_prefetch = 0 : i64, scratch_operands = 0 : i64, tpu.core_type = #tpu.core_type<tc>, window_params = [{transform_indices = @transform_0, window_bounds = array<i64: 2, 8, 128>}, {transform_indices = @transform_1, window_bounds = array<i64: 2, 128, 128>}, {pipeline_mode = #tpu.pipeline_mode<synchronous>, transform_indices = @transform_2, window_bounds = array<i64: 128, 128>}, {pipeline_mode = #tpu.pipeline_mode<synchronous>, transform_indices = @transform_3, window_bounds = array<i64: 128, 128>}, {pipeline_mode = #tpu.pipeline_mode<synchronous>, transform_indices = @transform_4, window_bounds = array<i64: 1, 128>}, {pipeline_mode = #tpu.pipeline_mode<synchronous>, transform_indices = @transform_5, window_bounds = array<i64: 1, 1, 128>}, {transform_indices = @transform_6, window_bounds = array<i64: 2, 8, 128>}, {transform_indices = @transform_7, window_bounds = array<i64: 2, 8, 128>}]} {
    %c0 = arith.constant 0 : index
    %c0_0 = arith.constant 0 : index
    %c0_1 = arith.constant 0 : index
    %0 = vector.load %arg1[%c0, %c0_0, %c0_1] : memref<2x8x128xf32, #tpu.memory_space<vmem>>, vector<2x8x128xf32>
    %c0_2 = arith.constant 0 : index
    %c0_3 = arith.constant 0 : index
    %c0_4 = arith.constant 0 : index
    %1 = vector.load %arg2[%c0_2, %c0_3, %c0_4] : memref<2x128x128xf32, #tpu.memory_space<vmem>>, vector<2x128x128xf32>
    "tpu.trace_start"() <{level = 10 : i32, message = "bod,bid->boi"}> : () -> ()
    %cst = arith.constant dense<0.000000e+00> : vector<2x8x128xf32>
    %2 = tpu.matmul %0, %1, %cst {dimension_numbers = #tpu.dot_dimension_numbers<[2], [2], [1], [1], [0, 0, 0, 1, 1, 1], [0], [0]>} : vector<2x8x128xf32>, vector<2x128x128xf32>, vector<2x8x128xf32> -> vector<2x8x128xf32>
    "tpu.trace_stop"() : () -> ()
    %c0_5 = arith.constant 0 : index
    %c0_6 = arith.constant 0 : index
    %c0_7 = arith.constant 0 : index
    %3 = vector.load %arg6[%c0_5, %c0_6, %c0_7] : memref<1x1x128xf32, #tpu.memory_space<vmem>>, vector<1x1x128xf32>
    %4 = vector.broadcast %3 : vector<1x1x128xf32> to vector<2x8x128xf32>
    %5 = arith.addf %2, %4 : vector<2x8x128xf32>
    %cst_8 = arith.constant dense<0xFF800000> : vector<2x8xf32>
    %6 = vector.multi_reduction <maximumf>, %5, %cst_8 [2] : vector<2x8x128xf32> to vector<2x8xf32>
    %7 = vector.shape_cast %6 : vector<2x8xf32> to vector<2x8x1xf32>
    %8 = vector.broadcast %7 : vector<2x8x1xf32> to vector<2x8x128xf32>
    %9 = arith.subf %5, %8 : vector<2x8x128xf32>
    %10 = math.exp %9 : vector<2x8x128xf32>
    %cst_9 = arith.constant dense<0.000000e+00> : vector<2x8xf32>
    %11 = vector.multi_reduction <add>, %10, %cst_9 [2] : vector<2x8x128xf32> to vector<2x8xf32>
    %12 = vector.shape_cast %11 : vector<2x8xf32> to vector<2x8x1xf32>
    %cst_10 = arith.constant 1.000000e+00 : f32
    %13 = vector.broadcast %cst_10 : f32 to vector<2x8x1xf32>
    %14 = arith.divf %13, %12 : vector<2x8x1xf32>
    %15 = vector.broadcast %14 : vector<2x8x1xf32> to vector<2x8x128xf32>
    %16 = arith.mulf %10, %15 : vector<2x8x128xf32>
    %c0_11 = arith.constant 0 : index
    %c0_12 = arith.constant 0 : index
    %c0_13 = arith.constant 0 : index
    %17 = vector.load %arg8[%c0_11, %c0_12, %c0_13] : memref<2x8x128xf32, #tpu.memory_space<vmem>>, vector<2x8x128xf32>
    tpu.vector_store %arg8[%c0_11, %c0_12, %c0_13], %16 {strides = array<i32>} : memref<2x8x128xf32, #tpu.memory_space<vmem>>, vector<2x8x128xf32>,
    "tpu.trace_start"() <{level = 10 : i32, message = "boi,bid->bod"}> : () -> ()
    %cst_14 = arith.constant dense<0.000000e+00> : vector<2x8x128xf32>
    %18 = tpu.matmul %16, %1, %cst_14 {dimension_numbers = #tpu.dot_dimension_numbers<[2], [1], [1], [2], [0, 0, 0, 1, 1, 2], [0], [0]>} : vector<2x8x128xf32>, vector<2x128x128xf32>, vector<2x8x128xf32> -> vector<2x8x128xf32>
    "tpu.trace_stop"() : () -> ()
    %19 = vector.shape_cast %18 : vector<2x8x128xf32> to vector<16x128xf32>
    %20 = vector.shape_cast %0 : vector<2x8x128xf32> to vector<16x128xf32>
    %c0_15 = arith.constant 0 : index
    %c0_16 = arith.constant 0 : index
    %21 = vector.load %arg3[%c0_15, %c0_16] : memref<128x128xf32, #tpu.memory_space<vmem>>, vector<128x128xf32>
    %cst_17 = arith.constant dense<0.000000e+00> : vector<16x128xf32>
    %22 = tpu.matmul %19, %21, %cst_17 {dimension_numbers = #tpu.dot_dimension_numbers<[1], [0], [0], [1], [0, 0, 1, 1], [], []>} : vector<16x128xf32>, vector<128x128xf32>, vector<16x128xf32> -> vector<16x128xf32>
    %c0_18 = arith.constant 0 : index
    %c0_19 = arith.constant 0 : index
    %23 = vector.load %arg4[%c0_18, %c0_19] : memref<128x128xf32, #tpu.memory_space<vmem>>, vector<128x128xf32>
    %cst_20 = arith.constant dense<0.000000e+00> : vector<16x128xf32>
    %24 = tpu.matmul %20, %23, %cst_20 {dimension_numbers = #tpu.dot_dimension_numbers<[1], [0], [0], [1], [0, 0, 1, 1], [], []>} : vector<16x128xf32>, vector<128x128xf32>, vector<16x128xf32> -> vector<16x128xf32>
    %25 = arith.addf %22, %24 : vector<16x128xf32>
    %c0_21 = arith.constant 0 : index
    %c0_22 = arith.constant 0 : index
    %26 = vector.load %arg5[%c0_21, %c0_22] : memref<1x128xf32, #tpu.memory_space<vmem>>, vector<1x128xf32>
    %27 = vector.broadcast %26 : vector<1x128xf32> to vector<16x128xf32>
    %28 = arith.addf %25, %27 : vector<16x128xf32>
    %29 = math.tanh %28 : vector<16x128xf32>
    %30 = vector.shape_cast %29 : vector<16x128xf32> to vector<2x8x128xf32>
    %c0_23 = arith.constant 0 : index
    %c0_24 = arith.constant 0 : index
    %c0_25 = arith.constant 0 : index
    %31 = vector.load %arg7[%c0_23, %c0_24, %c0_25] : memref<2x8x128xf32, #tpu.memory_space<vmem>>, vector<2x8x128xf32>
    tpu.vector_store %arg7[%c0_23, %c0_24, %c0_25], %30 {strides = array<i32>} : memref<2x8x128xf32, #tpu.memory_space<vmem>>, vector<2x8x128xf32>,
    return
  }
  func.func @transform_0(%arg0: i32) -> (i32, i32, i32) {
    %c0_i32 = arith.constant 0 : i32
    %c0_i32_0 = arith.constant 0 : i32
    %c0_i32_1 = arith.constant 0 : i32
    return %arg0, %c0_i32, %c0_i32_0 : i32, i32, i32
  }
  func.func @transform_1(%arg0: i32) -> (i32, i32, i32) {
    %c0_i32 = arith.constant 0 : i32
    %c0_i32_0 = arith.constant 0 : i32
    %c0_i32_1 = arith.constant 0 : i32
    return %arg0, %c0_i32, %c0_i32_0 : i32, i32, i32
  }
  func.func @transform_2(%arg0: i32) -> (i32, i32) {
    %c0_i32 = arith.constant 0 : i32
    %c0_i32_0 = arith.constant 0 : i32
    %c0_i32_1 = arith.constant 0 : i32
    return %c0_i32, %c0_i32_0 : i32, i32
  }
  func.func @transform_3(%arg0: i32) -> (i32, i32) {
    %c0_i32 = arith.constant 0 : i32
    %c0_i32_0 = arith.constant 0 : i32
    %c0_i32_1 = arith.constant 0 : i32
    return %c0_i32, %c0_i32_0 : i32, i32
  }
  func.func @transform_4(%arg0: i32) -> (i32, i32) {
    %c0_i32 = arith.constant 0 : i32
    %c0_i32_0 = arith.constant 0 : i32
    %c0_i32_1 = arith.constant 0 : i32
    return %c0_i32, %c0_i32_0 : i32, i32
  }
  func.func @transform_5(%arg0: i32) -> (i32, i32, i32) {
    %c0_i32 = arith.constant 0 : i32
    %c0_i32_0 = arith.constant 0 : i32
    %c0_i32_1 = arith.constant 0 : i32
    %c0_i32_2 = arith.constant 0 : i32
    return %c0_i32, %c0_i32_0, %c0_i32_1 : i32, i32, i32
  }
  func.func @transform_6(%arg0: i32) -> (i32, i32, i32) {
    %c0_i32 = arith.constant 0 : i32
    %c0_i32_0 = arith.constant 0 : i32
    %c0_i32_1 = arith.constant 0 : i32
    return %arg0, %c0_i32, %c0_i32_0 : i32, i32, i32
  }
  func.func @transform_7(%arg0: i32) -> (i32, i32, i32) {
    %c0_i32 = arith.constant 0 : i32
    %c0_i32_0 = arith.constant 0 : i32
    %c0_i32_1 = arith.constant 0 : i32
    return %arg0, %c0_i32, %c0_i32_0 : i32, i32, i32
  }
}

</mosaic_0001>

<llo_original>
// kernel: tpu_custom_call.1
$region0: #{tpu_custom_call.1}
  #allocation0 [shape = 'u32[]', space=smem, size = 0x4, offset = 0x4, fixed_abs, tag = 'smem constant byte address 0x4 - core index']
  #allocation1 [shape = 'u32[72,128]{1,0:T(1,128)}', space=vmem, size = 0x9000, scoped, tag = 'internal scratch']
  %s0 = inlined_call_operand.hbm [shape: f32[2,8,128], index: 0, kind: input, shape index: {}]
  %s1 = inlined_call_operand.hbm [shape: f32[2,128,128], index: 1, kind: input, shape index: {}]
  %s2 = inlined_call_operand.hbm [shape: f32[128,128], index: 2, kind: input, shape index: {}]
  %s3 = inlined_call_operand.hbm [shape: f32[128,128], index: 3, kind: input, shape index: {}]
  %s4 = inlined_call_operand.vmem [shape: f32[1,128], index: 4, kind: input, shape index: {}]
  %s5 = inlined_call_operand.vmem [shape: f32[1,1,128], index: 5, kind: input, shape index: {}]
  %s6 = inlined_call_operand.hbm [shape: f32[2,8,128], index: 6, kind: output, shape index: {0}]
  %s7 = inlined_call_operand.hbm [shape: f32[2,8,128], index: 7, kind: output, shape index: {1}]
  %8 = xla_tuple %s6, %s7
  %s9 = sld [smem:[#allocation0]]
  $region58: #{tpu_custom_call.1} parent=0
    _
  %s11 = ssub.s32 1, %s9
  %s12 = scalar_select 0, %s11, %s9
  $region1: #{tpu_custom_call.1} parent=0
    #allocation2 [shape = 'u8[8192]{0}', space=vmem, size = 0x2000, scoped, tag = 'input window, operand 0, single buffered']
    #allocation3 [shape = 's32[1]{0}', space=sflag, size = 0x4, scoped, tag = 'scoped memory for tpu_custom_call.1']
    #allocation4 [shape = 's32[1]{0}', space=sflag, size = 0x4, scoped, tag = 'scoped memory for tpu_custom_call.1']
    #allocation5 [shape = 'u8[131072]{0}', space=vmem, size = 0x20000, scoped, tag = 'input window, operand 1, single buffered']
    #allocation6 [shape = 's32[1]{0}', space=sflag, size = 0x4, scoped, tag = 'scoped memory for tpu_custom_call.1']
    #allocation7 [shape = 'u8[65536]{0}', space=vmem, size = 0x10000, scoped, tag = 'input window, operand 2, single buffered']
    #allocation8 [shape = 'u8[65536]{0}', space=vmem, size = 0x10000, scoped, tag = 'input window, operand 3, single buffered']
    #allocation9 [shape = 's32[1]{0}', space=sflag, size = 0x4, scoped, tag = 'scoped memory for tpu_custom_call.1']
    #allocation10 [shape = 'u8[8192]{0}', space=vmem, size = 0x2000, scoped, tag = 'output window, operand 0, single buffered']
    #allocation11 [shape = 'u8[8192]{0}', space=vmem, size = 0x2000, scoped, tag = 'output window, operand 1, single buffered']
    #allocation12 [shape = 's32[1]{0}', space=sflag, size = 0x4, scoped, tag = 'scoped memory for tpu_custom_call.1']
    %13 = vsyncpa [#allocation3], 0
    %14 = vsyncpa [#allocation6], 0
    %15 = vsyncpa [#allocation9], 0
    %16 = vsyncpa [#allocation4], 0
    %17 = vsyncpa [#allocation12], 0
    // Predicated region
    $region2: #{tpu_custom_call.1} parent=1 // pred_check
      _
    $region3: #{tpu_custom_call.1} parent=1 // pred_check_branch
      %19 = sbr.rel (0) target = $region5
    $region4: #{tpu_custom_call.1} parent=1 // pred_region
      %21 = vsyncadd [#allocation3], 0
      %s22 = sshll.u32 %s0, 4
      %s23 = int_to_ptr.hbm [resolvable:$true] %s22
      %s24 = sshll.u32 [#allocation2], 4
      %s25 = int_to_ptr.vmem [resolvable:$true] %s24
      %30 = dma.hbm_to_vmem [thread:$0]  %s23, 256, %s25, [#allocation3], 128, 128, 8
    $region5: #{tpu_custom_call.1} parent=1 // pred_fallthru
      _
    // Predicated region
    $region6: #{tpu_custom_call.1} parent=1 // pred_check
      _
    $region7: #{tpu_custom_call.1} parent=1 // pred_check_branch
      %32 = sbr.rel (0) target = $region9
    $region8: #{tpu_custom_call.1} parent=1 // pred_region
      %34 = vsyncadd [#allocation6], 0
      %s35 = sshll.u32 %s1, 4
      %s36 = int_to_ptr.hbm [resolvable:$true] %s35
      %s37 = sshll.u32 [#allocation5], 4
      %s38 = int_to_ptr.vmem [resolvable:$true] %s37
      %43 = dma.hbm_to_vmem [thread:$0]  %s36, 4096, %s38, [#allocation6], 128, 128, 8
    $region9: #{tpu_custom_call.1} parent=1 // pred_fallthru
      _
    // Predicated region
    $region10: #{tpu_custom_call.1} parent=1 // pred_check
      _
    $region11: #{tpu_custom_call.1} parent=1 // pred_check_branch
      %45 = sbr.rel (0) target = $region13
    $region12: #{tpu_custom_call.1} parent=1 // pred_region
      %47 = vsyncadd [#allocation6], 0
      %s48 = sshll.u32 %s2, 4
      %s49 = int_to_ptr.hbm [resolvable:$true] %s48
      %s50 = sshll.u32 [#allocation7], 4
      %s51 = int_to_ptr.vmem [resolvable:$true] %s50
      %56 = dma.hbm_to_vmem [thread:$0]  %s49, 2048, %s51, [#allocation6], 128, 128, 8
    $region13: #{tpu_custom_call.1} parent=1 // pred_fallthru
      _
    // Predicated region
    $region14: #{tpu_custom_call.1} parent=1 // pred_check
      _
    $region15: #{tpu_custom_call.1} parent=1 // pred_check_branch
      %58 = sbr.rel (0) target = $region17
    $region16: #{tpu_custom_call.1} parent=1 // pred_region
      %60 = vsyncadd [#allocation9], 0
      %s61 = sshll.u32 %s3, 4
      %s62 = int_to_ptr.hbm [resolvable:$true] %s61
      %s63 = sshll.u32 [#allocation8], 4
      %s64 = int_to_ptr.vmem [resolvable:$true] %s63
      %69 = dma.hbm_to_vmem [thread:$0]  %s62, 2048, %s64, [#allocation9], 128, 128, 8
    $region17: #{tpu_custom_call.1} parent=1 // pred_fallthru
      _
    // Predicated region
    $region18: #{tpu_custom_call.1} parent=1 // pred_check
      _
    $region19: #{tpu_custom_call.1} parent=1 // pred_check_branch
      %71 = sbr.rel (0) target = $region21
    $region20: #{tpu_custom_call.1} parent=1 // pred_region
      _
    $region21: #{tpu_custom_call.1} parent=1 // pred_fallthru
      _
    // Predicated region
    $region22: #{tpu_custom_call.1} parent=1 // pred_check
      _
    $region23: #{tpu_custom_call.1} parent=1 // pred_check_branch
      %73 = sbr.rel (0) target = $region25
    $region24: #{tpu_custom_call.1} parent=1 // pred_region
      _
    $region25: #{tpu_custom_call.1} parent=1 // pred_fallthru
      _
    // Predicated region
    $region26: #{tpu_custom_call.1} parent=1 // pred_check
      _
    $region27: #{tpu_custom_call.1} parent=1 // pred_check_branch
      %75 = sbr.rel (0) target = $region29
    $region28: #{tpu_custom_call.1} parent=1 // pred_region
      %77 = dma.done [#allocation3], 256
    $region29: #{tpu_custom_call.1} parent=1 // pred_fallthru
      _
    // Predicated region
    $region30: #{tpu_custom_call.1} parent=1 // pred_check
      _
    $region31: #{tpu_custom_call.1} parent=1 // pred_check_branch
      %79 = sbr.rel (0) target = $region33
    $region32: #{tpu_custom_call.1} parent=1 // pred_region
      %81 = dma.done [#allocation6], 4096
    $region33: #{tpu_custom_call.1} parent=1 // pred_fallthru
      _
    // Predicated region
    $region34: #{tpu_custom_call.1} parent=1 // pred_check
      _
    $region35: #{tpu_custom_call.1} parent=1 // pred_check_branch
      %83 = sbr.rel (0) target = $region37
    $region36: #{tpu_custom_call.1} parent=1 // pred_region
      %85 = dma.done [#allocation6], 2048
    $region37: #{tpu_custom_call.1} parent=1 // pred_fallthru
      _
    // Predicated region
    $region38: #{tpu_custom_call.1} parent=1 // pred_check
      _
    $region39: #{tpu_custom_call.1} parent=1 // pred_check_branch
      %87 = sbr.rel (0) target = $region41
    $region40: #{tpu_custom_call.1} parent=1 // pred_region
      %89 = dma.done [#allocation9], 2048
    $region41: #{tpu_custom_call.1} parent=1 // pred_fallthru
      _
    %v90 = vld [vmem:[#allocation2] sm:$0xff]
    %v91 = vld [vmem:[#allocation2 + $0x8] sm:$0xff]
    %v92 = vld [vmem:[#allocation5] sm:$0xff]
    %v93 = vld [vmem:[#allocation5 + $0x8] sm:$0xff]
    %v94 = vld [vmem:[#allocation5 + $0x10] sm:$0xff]
    %v95 = vld [vmem:[#allocation5 + $0x18] sm:$0xff]
    %v96 = vld [vmem:[#allocation5 + $0x20] sm:$0xff]
    %v97 = vld [vmem:[#allocation5 + $0x28] sm:$0xff]
    %v98 = vld [vmem:[#allocation5 + $0x30] sm:$0xff]
    %v99 = vld [vmem:[#allocation5 + $0x38] sm:$0xff]
    %v100 = vld [vmem:[#allocation5 + $0x40] sm:$0xff]
    %v101 = vld [vmem:[#allocation5 + $0x48] sm:$0xff]
    %v102 = vld [vmem:[#allocation5 + $0x50] sm:$0xff]
    %v103 = vld [vmem:[#allocation5 + $0x58] sm:$0xff]
    %v104 = vld [vmem:[#allocation5 + $0x60] sm:$0xff]
    %v105 = vld [vmem:[#allocation5 + $0x68] sm:$0xff]
    %v106 = vld [vmem:[#allocation5 + $0x70] sm:$0xff]
    %v107 = vld [vmem:[#allocation5 + $0x78] sm:$0xff]
    %v108 = vld [vmem:[#allocation5 + $0x80] sm:$0xff]
    %v109 = vld [vmem:[#allocation5 + $0x88] sm:$0xff]
    %v110 = vld [vmem:[#allocation5 + $0x90] sm:$0xff]
    %v111 = vld [vmem:[#allocation5 + $0x98] sm:$0xff]
    %v112 = vld [vmem:[#allocation5 + $0xa0] sm:$0xff]
    %v113 = vld [vmem:[#allocation5 + $0xa8] sm:$0xff]
    %v114 = vld [vmem:[#allocation5 + $0xb0] sm:$0xff]
    %v115 = vld [vmem:[#allocation5 + $0xb8] sm:$0xff]
    %v116 = vld [vmem:[#allocation5 + $0xc0] sm:$0xff]
    %v117 = vld [vmem:[#allocation5 + $0xc8] sm:$0xff]
    %v118 = vld [vmem:[#allocation5 + $0xd0] sm:$0xff]
    %v119 = vld [vmem:[#allocation5 + $0xd8] sm:$0xff]
    %v120 = vld [vmem:[#allocation5 + $0xe0] sm:$0xff]
    %v121 = vld [vmem:[#allocation5 + $0xe8] sm:$0xff]
    %v122 = vld [vmem:[#allocation5 + $0xf0] sm:$0xff]
    %v123 = vld [vmem:[#allocation5 + $0xf8] sm:$0xff]
    %v124 = vld [vmem:[%s5] sm:$0x1]
    %v126 = vperm.slane %v124, 0
    %128 = vmatpush.xpose.msra.mxu0 %v107
    %129 = vmatpush.xpose.msra.mxu0 %v106
    %130 = vmatpush.xpose.msra.mxu0 %v105
    %131 = vmatpush.xpose.msra.mxu0 %v104
    %132 = vmatpush.xpose.msra.mxu0 %v103
    %133 = vmatpush.xpose.msra.mxu0 %v102
    %134 = vmatpush.xpose.msra.mxu0 %v101
    %135 = vmatpush.xpose.msra.mxu0 %v100
    %136 = vmatpush.xpose.msra.mxu0 %v99
    %137 = vmatpush.xpose.msra.mxu0 %v98
    %138 = vmatpush.xpose.msra.mxu0 %v97
    %139 = vmatpush.xpose.msra.mxu0 %v96
    %140 = vmatpush.xpose.msra.mxu0 %v95
    %141 = vmatpush.xpose.msra.mxu0 %v94
    %142 = vmatpush.xpose.msra.mxu0 %v93
    %143 = vmatpush.xpose.msra.mxu0 %v92
    %144 = vmatmul.f32.gmra.mxu0 %v90
    %v145 = vpop.f32.mrf.mxu0
    %v146 = vadd.f32 %v126, %v145
    %147 = vdwg.mxu0
    %148 = vmatpush.xpose.msra.mxu0 %v123
    %149 = vmatpush.xpose.msra.mxu0 %v122
    %150 = vmatpush.xpose.msra.mxu0 %v121
    %151 = vmatpush.xpose.msra.mxu0 %v120
    %152 = vmatpush.xpose.msra.mxu0 %v119
    %153 = vmatpush.xpose.msra.mxu0 %v118
    %154 = vmatpush.xpose.msra.mxu0 %v117
    %155 = vmatpush.xpose.msra.mxu0 %v116
    %156 = vmatpush.xpose.msra.mxu0 %v115
    %157 = vmatpush.xpose.msra.mxu0 %v114
    %158 = vmatpush.xpose.msra.mxu0 %v113
    %159 = vmatpush.xpose.msra.mxu0 %v112
    %160 = vmatpush.xpose.msra.mxu0 %v111
    %161 = vmatpush.xpose.msra.mxu0 %v110
    %162 = vmatpush.xpose.msra.mxu0 %v109
    %163 = vmatpush.xpose.msra.mxu0 %v108
    %164 = vmatmul.f32.gmra.mxu0 %v91
    %v165 = vpop.f32.mrf.mxu0
    %v166 = vadd.f32 %v126, %v165
    %167 = vdwg.mxu0
    %168 = vmax.xlane.f32.xlu0 %v146
    %v169 = vpop.xlane.xlu0 %168
    %170 = vmax.xlane.f32.xlu0 %v166
    %v171 = vpop.xlane.xlu0 %170
    %v172 = vsub.f32 %v146, %v169
    %v173 = vsub.f32 %v166, %v171
    %v174 = vmul.f32 %v172, 1.442695
    %v175 = vpow.pop %v174
    %v176 = vmul.f32 %v173, 1.442695
    %v177 = vpow.pop %v176
    %178 = vadd.xlane.f32.xlu0 %v175
    %v179 = vpop.xlane.xlu0 %178
    %180 = vadd.xlane.f32.xlu0 %v177
    %v181 = vpop.xlane.xlu0 %180
    %v182 = vrcp.pop %v179
    %v183 = vmul.f32 %v179, %v182
    %v184 = vsub.f32 1.0, %v183
    %v185 = vmul.f32 %v182, %v184
    %v186 = vadd.f32 %v182, %v185
    %vm187 = vweird.f32 %v179
    %vm188 = vweird.f32 %v182
    %vm189 = vmor %vm187, %vm188
    %v190 = vsel %vm189, %v182, %v186
    %v191 = vand.u32 2147483647, %v179
    %vm192 = vcmp.eq.f32.partialorder %v191, 8.507059e+37
    %v193 = vand.u32 %v179, 2147483648
    %v194 = vor.u32 1.1754944e-38, %v193
    %v195 = vsel %vm192, %v194, %v190
    %v196 = vmul.f32 1.0, %v195
    %v197 = vrcp.pop %v181
    %v198 = vmul.f32 %v181, %v197
    %v199 = vsub.f32 1.0, %v198
    %v200 = vmul.f32 %v197, %v199
    %v201 = vadd.f32 %v197, %v200
    %vm202 = vweird.f32 %v181
    %vm203 = vweird.f32 %v197
    %vm204 = vmor %vm202, %vm203
    %v205 = vsel %vm204, %v197, %v201
    %v206 = vand.u32 2147483647, %v181
    %vm207 = vcmp.eq.f32.partialorder %v206, 8.507059e+37
    %v208 = vand.u32 %v181, 2147483648
    %v209 = vor.u32 1.1754944e-38, %v208
    %v210 = vsel %vm207, %v209, %v205
    %v211 = vmul.f32 1.0, %v210
    %v212 = vmul.f32 %v175, %v196
    %v213 = vmul.f32 %v177, %v211
    %214 = vst [vmem:[#allocation11] sm:$0xff] %v212
    %215 = vst [vmem:[#allocation11 + $0x8] sm:$0xff] %v213
    %216 = vmatpush.msra.mxu0 %v107
    %217 = vmatpush.msra.mxu0 %v106
    %218 = vmatpush.msra.mxu0 %v105
    %219 = vmatpush.msra.mxu0 %v104
    %220 = vmatpush.msra.mxu0 %v103
    %221 = vmatpush.msra.mxu0 %v102
    %222 = vmatpush.msra.mxu0 %v101
    %223 = vmatpush.msra.mxu0 %v100
    %224 = vmatpush.msra.mxu0 %v99
    %225 = vmatpush.msra.mxu0 %v98
    %226 = vmatpush.msra.mxu0 %v97
    %227 = vmatpush.msra.mxu0 %v96
    %228 = vmatpush.msra.mxu0 %v95
    %229 = vmatpush.msra.mxu0 %v94
    %230 = vmatpush.msra.mxu0 %v93
    %231 = vmatpush.msra.mxu0 %v92
    %232 = vmatmul.f32.gmra.mxu0 %v212
    %v233 = vpop.f32.mrf.mxu0
    %v234 = vadd.f32 0.0, %v233
    %235 = vdwg.mxu0
    %236 = vmatpush.msra.mxu0 %v123
    %237 = vmatpush.msra.mxu0 %v122
    %238 = vmatpush.msra.mxu0 %v121
    %239 = vmatpush.msra.mxu0 %v120
    %240 = vmatpush.msra.mxu0 %v119
    %241 = vmatpush.msra.mxu0 %v118
    %242 = vmatpush.msra.mxu0 %v117
    %243 = vmatpush.msra.mxu0 %v116
    %244 = vmatpush.msra.mxu0 %v115
    %245 = vmatpush.msra.mxu0 %v114
    %246 = vmatpush.msra.mxu0 %v113
    %247 = vmatpush.msra.mxu0 %v112
    %248 = vmatpush.msra.mxu0 %v111
    %249 = vmatpush.msra.mxu0 %v110
    %250 = vmatpush.msra.mxu0 %v109
    %251 = vmatpush.msra.mxu0 %v108
    %252 = vmatmul.f32.gmra.mxu0 %v213
    %v253 = vpop.f32.mrf.mxu0
    %v254 = vadd.f32 0.0, %v253
    %255 = vdwg.mxu0
    %v256 = vld [vmem:[#allocation7] sm:$0xff]
    %v257 = vld [vmem:[#allocation7 + $0x8] sm:$0xff]
    %v258 = vld [vmem:[#allocation7 + $0x10] sm:$0xff]
    %v259 = vld [vmem:[#allocation7 + $0x18] sm:$0xff]
    %v260 = vld [vmem:[#allocation7 + $0x20] sm:$0xff]
    %v261 = vld [vmem:[#allocation7 + $0x28] sm:$0xff]
    %v262 = vld [vmem:[#allocation7 + $0x30] sm:$0xff]
    %v263 = vld [vmem:[#allocation7 + $0x38] sm:$0xff]
    %v264 = vld [vmem:[#allocation7 + $0x40] sm:$0xff]
    %v265 = vld [vmem:[#allocation7 + $0x48] sm:$0xff]
    %v266 = vld [vmem:[#allocation7 + $0x50] sm:$0xff]
    %v267 = vld [vmem:[#allocation7 + $0x58] sm:$0xff]
    %v268 = vld [vmem:[#allocation7 + $0x60] sm:$0xff]
    %v269 = vld [vmem:[#allocation7 + $0x68] sm:$0xff]
    %v270 = vld [vmem:[#allocation7 + $0x70] sm:$0xff]
    %v271 = vld [vmem:[#allocation7 + $0x78] sm:$0xff]
    %v272 = vld [vmem:[#allocation8] sm:$0xff]
    %v273 = vld [vmem:[#allocation8 + $0x8] sm:$0xff]
    %v274 = vld [vmem:[#allocation8 + $0x10] sm:$0xff]
    %v275 = vld [vmem:[#allocation8 + $0x18] sm:$0xff]
    %v276 = vld [vmem:[#allocation8 + $0x20] sm:$0xff]
    %v277 = vld [vmem:[#allocation8 + $0x28] sm:$0xff]
    %v278 = vld [vmem:[#allocation8 + $0x30] sm:$0xff]
    %v279 = vld [vmem:[#allocation8 + $0x38] sm:$0xff]
    %v280 = vld [vmem:[#allocation8 + $0x40] sm:$0xff]
    %v281 = vld [vmem:[#allocation8 + $0x48] sm:$0xff]
    %v282 = vld [vmem:[#allocation8 + $0x50] sm:$0xff]
    %v283 = vld [vmem:[#allocation8 + $0x58] sm:$0xff]
    %v284 = vld [vmem:[#allocation8 + $0x60] sm:$0xff]
    %v285 = vld [vmem:[#allocation8 + $0x68] sm:$0xff]
    %v286 = vld [vmem:[#allocation8 + $0x70] sm:$0xff]
    %v287 = vld [vmem:[#allocation8 + $0x78] sm:$0xff]
    %288 = vmatpush.msra.mxu0 %v287
    %289 = vmatpush.msra.mxu0 %v286
    %290 = vmatpush.msra.mxu0 %v285
    %291 = vmatpush.msra.mxu0 %v284
    %292 = vmatpush.msra.mxu0 %v283
    %293 = vmatpush.msra.mxu0 %v282
    %294 = vmatpush.msra.mxu0 %v281
    %295 = vmatpush.msra.mxu0 %v280
    %296 = vmatpush.msra.mxu0 %v279
    %297 = vmatpush.msra.mxu0 %v278
    %298 = vmatpush.msra.mxu0 %v277
    %299 = vmatpush.msra.mxu0 %v276
    %300 = vmatpush.msra.mxu0 %v275
    %301 = vmatpush.msra.mxu0 %v274
    %302 = vmatpush.msra.mxu0 %v273
    %303 = vmatpush.msra.mxu0 %v272
    %304 = vmatmul.f32.gmra.mxu0 %v90
    %v305 = vpop.f32.mrf.mxu0
    %v306 = vadd.f32 0.0, %v305
    %307 = vmatmul.f32.gmra.mxu0 %v91
    %v308 = vpop.f32.mrf.mxu0
    %v309 = vadd.f32 0.0, %v308
    %310 = vdwg.mxu0
    %311 = vmatpush.msra.mxu0 %v271
    %312 = vmatpush.msra.mxu0 %v270
    %313 = vmatpush.msra.mxu0 %v269
    %314 = vmatpush.msra.mxu0 %v268
    %315 = vmatpush.msra.mxu0 %v267
    %316 = vmatpush.msra.mxu0 %v266
    %317 = vmatpush.msra.mxu0 %v265
    %318 = vmatpush.msra.mxu0 %v264
    %319 = vmatpush.msra.mxu0 %v263
    %320 = vmatpush.msra.mxu0 %v262
    %321 = vmatpush.msra.mxu0 %v261
    %322 = vmatpush.msra.mxu0 %v260
    %323 = vmatpush.msra.mxu0 %v259
    %324 = vmatpush.msra.mxu0 %v258
    %325 = vmatpush.msra.mxu0 %v257
    %326 = vmatpush.msra.mxu0 %v256
    %327 = vmatmul.f32.gmra.mxu0 %v234
    %v328 = vpop.f32.mrf.mxu0
    %v329 = vadd.f32 %v306, %v328
    %330 = vmatmul.f32.gmra.mxu0 %v254
    %v331 = vpop.f32.mrf.mxu0
    %v332 = vadd.f32 %v309, %v331
    %333 = vdwg.mxu0
    %v334 = vld [vmem:[%s4] sm:$0x1]
    %v336 = vperm.slane %v334, 0
    %v338 = vadd.f32 %v329, %v336
    %v339 = vadd.f32 %v332, %v336
    %v340 = vtanh.pop %v338
    %v341 = vtanh.pop %v339
    %342 = vst [vmem:[#allocation10] sm:$0xff] %v340
    %343 = vst [vmem:[#allocation10 + $0x8] sm:$0xff] %v341
    // Predicated region
    $region42: #{tpu_custom_call.1} parent=1 // pred_check
      _
    $region43: #{tpu_custom_call.1} parent=1 // pred_check_branch
      %345 = sbr.rel (0) target = $region45
    $region44: #{tpu_custom_call.1} parent=1 // pred_region
      %347 = vsyncadd [#allocation4], 0
      %s348 = sshll.u32 [#allocation10], 4
      %s349 = int_to_ptr.vmem [resolvable:$true] %s348
      %s350 = sshll.u32 %s6, 4
      %s351 = int_to_ptr.hbm [resolvable:$true] %s350
      %356 = dma.vmem_to_hbm [thread:$0]  %s349, 256, %s351, [#allocation4], 128, 128, 8
    $region45: #{tpu_custom_call.1} parent=1 // pred_fallthru
      _
    // Predicated region
    $region46: #{tpu_custom_call.1} parent=1 // pred_check
      _
    $region47: #{tpu_custom_call.1} parent=1 // pred_check_branch
      %358 = sbr.rel (0) target = $region49
    $region48: #{tpu_custom_call.1} parent=1 // pred_region
      %360 = vsyncadd [#allocation12], 0
      %s361 = sshll.u32 [#allocation11], 4
      %s362 = int_to_ptr.vmem [resolvable:$true] %s361
      %s363 = sshll.u32 %s7, 4
      %s364 = int_to_ptr.hbm [resolvable:$true] %s363
      %369 = dma.vmem_to_hbm [thread:$0]  %s362, 256, %s364, [#allocation12], 128, 128, 8
    $region49: #{tpu_custom_call.1} parent=1 // pred_fallthru
      _
    // Predicated region
    $region50: #{tpu_custom_call.1} parent=1 // pred_check
      _
    $region51: #{tpu_custom_call.1} parent=1 // pred_check_branch
      %371 = sbr.rel (0) target = $region53
    $region52: #{tpu_custom_call.1} parent=1 // pred_region
      %373 = dma.done [#allocation4], 256
    $region53: #{tpu_custom_call.1} parent=1 // pred_fallthru
      _
    // Predicated region
    $region54: #{tpu_custom_call.1} parent=1 // pred_check
      _
    $region55: #{tpu_custom_call.1} parent=1 // pred_check_branch
      %375 = sbr.rel (0) target = $region57
    $region56: #{tpu_custom_call.1} parent=1 // pred_region
      %377 = dma.done [#allocation12], 256
    $region57: #{tpu_custom_call.1} parent=1 // pred_fallthru
      _
    %378 = vsyncpa [#allocation3], 1
    %379 = vsyncpa [#allocation6], 1
    %380 = vsyncpa [#allocation9], 1
    %381 = vsyncpa [#allocation4], 1
    %382 = vsyncpa [#allocation12], 1

</llo_original>
